<compile_context>
chip_gen: v6e
topology: v6e:2x2x1
jax: 0.10.0
libtpu: 0.0.40
codegen_flags: <defaults>
</compile_context>

<pallas_src>
import functools

import jax
import jax.numpy as jnp
from jax.experimental import pallas as pl
from jax.experimental.pallas import tpu as pltpu


def _masked_mse_kernel(inp_ref, tgt_ref, mask_ref, num_ref, den_ref,
                       num_acc, den_acc):
    # inp_ref/tgt_ref: (1, C, TILE_N) native dtype
    # mask_ref:        (1, 1, TILE_N) bf16
    # num_ref/den_ref: (1, 1, 128) f32 per-batch outputs (written at last N step)
    # num_acc/den_acc: (1, 1) f32 VMEM accumulators (persist across the N axis)
    n_id = pl.program_id(1)

    @pl.when(n_id == 0)
    def _init():
        num_acc[...] = jnp.zeros_like(num_acc)
        den_acc[...] = jnp.zeros_like(den_acc)

    inp = inp_ref[...].astype(jnp.float32)
    tgt = tgt_ref[...].astype(jnp.float32)
    msk = mask_ref[...].astype(jnp.float32)

    # finite_mask = isfinite(target).all(dim=channel)
    finite = jnp.min(jnp.isfinite(tgt).astype(jnp.float32), axis=1, keepdims=True)

    # target = nan_to_num(target); elementwise squared error
    tgt_c = jnp.nan_to_num(tgt)
    diff = inp - tgt_c
    loss = diff * diff                                            # (1, C, TILE_N)

    # loss.nanmean(dim=channel)  (kept exact: inputs may themselves carry NaN)
    is_nan = jnp.isnan(loss)
    loss_sum = jnp.sum(jnp.where(is_nan, 0.0, loss), axis=1, keepdims=True)
    cnt = jnp.sum(jnp.logical_not(is_nan).astype(jnp.float32), axis=1, keepdims=True)
    loss_c = loss_sum / cnt                  # NaN where cnt == 0 (matches nanmean)

    # mask = mask * finite_mask ; loss = loss * mask
    mm = msk * finite                                             # (1, 1, TILE_N)
    prod = loss_c * mm

    # accumulate per-batch nansum(loss) and sum(mask)
    num_acc[...] += jnp.sum(jnp.where(jnp.isnan(prod), 0.0, prod))
    den_acc[...] += jnp.sum(mm)

    @pl.when(n_id == pl.num_programs(1) - 1)
    def _finalize():
        num_ref[...] = jnp.broadcast_to(num_acc[...], num_ref.shape)
        den_ref[...] = jnp.broadcast_to(den_acc[...], den_ref.shape)


def _choose_tile_n(N, C, in_itemsize, mask_itemsize, vmem_budget_bytes, max_tile_n):
    """Largest multiple of 128 dividing N whose double-buffered tile fits the budget."""
    if N % 128 != 0:
        return N                       # single whole-row tile per batch (full-dim block)
    # 2 input arrays + mask, each double-buffered by the pipeline
    bytes_per_lane = 2 * (2 * C * in_itemsize + mask_itemsize)
    cap = max(128, vmem_budget_bytes // max(bytes_per_lane, 1))
    if max_tile_n is not None:
        cap = min(cap, max_tile_n)
    best = 128
    t = 128
    limit = min(N, cap)
    while t <= limit:
        if N % t == 0:
            best = t
        t += 128
    return best


def masked_mse_loss(inputs, target, mask=None, *, patch_size=16, stride=1,
                    t_patch_size=1, max_tile_n=None,
                    vmem_budget_bytes=12 * 1024 * 1024):
    """Pallas implementation of MaskedMSELoss.forward."""
    B, C, T, H, W = inputs.shape
    scale_factor = patch_size // stride

    if mask is None:
        # TODO(synk): unmasked branch (plain global mean) kept in JAX glue; the
        # interesting masked hot path is the Pallas kernel below.
        return jnp.mean((inputs.astype(jnp.float32) -
                         jnp.nan_to_num(target.astype(jnp.float32))) ** 2)

    nh, nw = H // scale_factor, W // scale_factor
    nt = T // t_patch_size

    # rearrange(mask, 'b (nt nh nw) -> b nt nh nw') + nearest interpolate to (T, H, W)
    mask4 = mask.reshape(B, nt, nh, nw)
    it = (jnp.arange(T) * nt) // T            # PyTorch 'nearest': floor(i * in / out)
    ih = (jnp.arange(H) * nh) // H
    iw = (jnp.arange(W) * nw) // W
    # bf16 storage: values are exactly 0/1, halves the mask's HBM traffic vs f32
    mask_up = mask4[:, it][:, :, ih][:, :, :, iw].astype(jnp.bfloat16)   # (B, T, H, W)

    N = T * H * W
    inp_f = inputs.reshape(B, C, N)           # native dtype -> no f32 copy in HBM
    tgt_f = target.reshape(B, C, N)
    msk_f = mask_up.reshape(B, 1, N)

    tile_n = _choose_tile_n(N, C, inputs.dtype.itemsize, msk_f.dtype.itemsize,
                            vmem_budget_bytes, max_tile_n)
    n_tiles = N // tile_n

    num_out, den_out = pl.pallas_call(
        _masked_mse_kernel,
        out_shape=(jax.ShapeDtypeStruct((B, 1, 128), jnp.float32),
                   jax.ShapeDtypeStruct((B, 1, 128), jnp.float32)),
        grid_spec=pltpu.PrefetchScalarGridSpec(
            num_scalar_prefetch=0,
            grid=(B, n_tiles),
            in_specs=[
                pl.BlockSpec((1, C, tile_n), lambda b, n: (b, 0, n)),
                pl.BlockSpec((1, C, tile_n), lambda b, n: (b, 0, n)),
                pl.BlockSpec((1, 1, tile_n), lambda b, n: (b, 0, n)),
            ],
            out_specs=[
                pl.BlockSpec((1, 1, 128), lambda b, n: (b, 0, 0)),
                pl.BlockSpec((1, 1, 128), lambda b, n: (b, 0, 0)),
            ],
            scratch_shapes=[pltpu.VMEM((1, 1), jnp.float32),
                            pltpu.VMEM((1, 1), jnp.float32)],
        ),
        compiler_params=pltpu.CompilerParams(
            dimension_semantics=("parallel", "arbitrary"),
            vmem_limit_bytes=32 * 1024 * 1024,
        ),
    )(inp_f, tgt_f, msk_f)

    num = num_out[:, 0, 0]                    # (B,)
    den = den_out[:, 0, 0]                    # (B,)
    per_batch = num / (den + 0.01)
    return jnp.nanmean(per_batch)             # loss.nanmean()


def _reference(inputs, target, mask, *, patch_size, stride, t_patch_size):
    """Pure-JAX mirror of the PyTorch forward (for correctness check)."""
    B, C, T, H, W = inputs.shape
    sf = patch_size // stride
    nh, nw, nt = H // sf, W // sf, T // t_patch_size
    finite = jnp.all(jnp.isfinite(target), axis=1)                # (B,T,H,W)
    tgt = jnp.nan_to_num(target)
    loss = (inputs - tgt) ** 2
    m4 = mask.reshape(B, nt, nh, nw).astype(jnp.float32)
    it = (jnp.arange(T) * nt) // T
    ih = (jnp.arange(H) * nh) // H
    iw = (jnp.arange(W) * nw) // W
    m = m4[:, it][:, :, ih][:, :, :, iw]
    loss = jnp.nanmean(loss, axis=1)
    m = m * finite.astype(jnp.float32)
    loss = loss * m
    num = jnp.nansum(loss.reshape(B, -1), axis=1)
    den = jnp.sum(m.reshape(B, -1), axis=1) + 0.01
    return jnp.nanmean(num / den)


if __name__ == "__main__":
    key = jax.random.PRNGKey(0)
    k1, k2, k3 = jax.random.split(key, 3)

    # small shapes: B=2, C=4, T=8, H=W=16  -> N = 2048
    B, C, T, H, W = 2, 4, 8, 16, 16
    patch_size, stride, t_patch_size = 16, 4, 2      # scale_factor=4 -> nh=nw=4, nt=4

    x = jax.random.normal(k1, (B, C, T, H, W), dtype=jnp.float32)
    y = jax.random.normal(k2, (B, C, T, H, W), dtype=jnp.float32)
    # inject a few non-finite target values to exercise finite_mask / nan_to_num
    y = y.at[0, 1, 2, 3, 4].set(jnp.nan)
    y = y.at[1, 0, 5, 7, 9].set(jnp.inf)

    nt = T // t_patch_size
    nh = H // (patch_size // stride)
    nw = W // (patch_size // stride)
    mask = jax.random.bernoulli(k3, p=0.5, shape=(B, nt * nh * nw)).astype(jnp.float32)

    # cap the tile so the small test exercises the multi-tile accumulation path
    loss_fn = functools.partial(masked_mse_loss, patch_size=patch_size,
                                stride=stride, t_patch_size=t_patch_size,
                                max_tile_n=512)

    out = jax.block_until_ready(loss_fn(x, y, mask))
    ref = _reference(x, y, mask, patch_size=patch_size, stride=stride,
                     t_patch_size=t_patch_size)
    assert jnp.allclose(out, ref, rtol=1e-5, atol=1e-6), (out, ref)

    # native-dtype (bf16) path: cast happens per tile inside the kernel, not in HBM
    out_bf16 = jax.block_until_ready(
        loss_fn(x.astype(jnp.bfloat16), y.astype(jnp.bfloat16), mask))
    assert jnp.isfinite(out_bf16), out_bf16
    assert jnp.allclose(out_bf16, ref, rtol=1e-1, atol=1e-3), (out_bf16, ref)

    print("KERNEL_OK")
</pallas_src>

<mosaic_0001>
module attributes {stable_mosaic.version = 11 : i64} {
  func.func @_masked_mse_kernel(%arg0: i32, %arg1: i32, %arg2: memref<1x4x512xf32, #tpu.memory_space<vmem>>, %arg3: memref<1x4x512xf32, #tpu.memory_space<vmem>>, %arg4: memref<1x1x512xbf16, #tpu.memory_space<vmem>>, %arg5: memref<1x1x128xf32, #tpu.memory_space<vmem>>, %arg6: memref<1x1x128xf32, #tpu.memory_space<vmem>>, %arg7: memref<1x1xf32, #tpu.memory_space<vmem>>, %arg8: memref<1x1xf32, #tpu.memory_space<vmem>>) attributes {dimension_semantics = [#tpu.dimension_semantics<parallel>, #tpu.dimension_semantics<arbitrary>], iteration_bounds = array<i64: 2, 4>, scalar_prefetch = 0 : i64, scratch_operands = 2 : i64, tpu.core_type = #tpu.core_type<tc>, window_params = [{transform_indices = @transform_0, window_bounds = array<i64: 1, 4, 512>}, {transform_indices = @transform_1, window_bounds = array<i64: 1, 4, 512>}, {transform_indices = @transform_2, window_bounds = array<i64: 1, 1, 512>}, {transform_indices = @transform_3, window_bounds = array<i64: 1, 1, 128>}, {transform_indices = @transform_4, window_bounds = array<i64: 1, 1, 128>}]} {
    %c0_i32 = arith.constant 0 : i32
    %0 = arith.cmpi eq, %arg1, %c0_i32 : i32
    %1 = arith.extui %0 : i1 to i32
    %c0_i32_0 = arith.constant 0 : i32
    %2 = arith.cmpi ne, %1, %c0_i32_0 : i32
    scf.if %2 {
      %cst_31 = arith.constant 0.000000e+00 : f32
      %61 = vector.broadcast %cst_31 : f32 to vector<1x1xf32>
      %c0_32 = arith.constant 0 : index
      %c0_33 = arith.constant 0 : index
      %62 = vector.load %arg7[%c0_32, %c0_33] : memref<1x1xf32, #tpu.memory_space<vmem>>, vector<1x1xf32>
      tpu.vector_store %arg7[%c0_32, %c0_33], %61 {strides = array<i32>} : memref<1x1xf32, #tpu.memory_space<vmem>>, vector<1x1xf32>,
      %cst_34 = arith.constant 0.000000e+00 : f32
      %63 = vector.broadcast %cst_34 : f32 to vector<1x1xf32>
      %c0_35 = arith.constant 0 : index
      %c0_36 = arith.constant 0 : index
      %64 = vector.load %arg8[%c0_35, %c0_36] : memref<1x1xf32, #tpu.memory_space<vmem>>, vector<1x1xf32>
      tpu.vector_store %arg8[%c0_35, %c0_36], %63 {strides = array<i32>} : memref<1x1xf32, #tpu.memory_space<vmem>>, vector<1x1xf32>,
    } else {
    }
    %c0 = arith.constant 0 : index
    %c0_1 = arith.constant 0 : index
    %c0_2 = arith.constant 0 : index
    %3 = vector.load %arg2[%c0, %c0_1, %c0_2] : memref<1x4x512xf32, #tpu.memory_space<vmem>>, vector<1x4x512xf32>
    %c0_3 = arith.constant 0 : index
    %c0_4 = arith.constant 0 : index
    %c0_5 = arith.constant 0 : index
    %4 = vector.load %arg3[%c0_3, %c0_4, %c0_5] : memref<1x4x512xf32, #tpu.memory_space<vmem>>, vector<1x4x512xf32>
    %c0_6 = arith.constant 0 : index
    %c0_7 = arith.constant 0 : index
    %c0_8 = arith.constant 0 : index
    %5 = vector.load %arg4[%c0_6, %c0_7, %c0_8] : memref<1x1x512xbf16, #tpu.memory_space<vmem>>, vector<1x1x512xbf16>
    %6 = arith.extf %5 : vector<1x1x512xbf16> to vector<1x1x512xf32>
    %7 = tpu.weird %4 : vector<1x4x512xf32> -> vector<1x4x512xi1>
    %cst = arith.constant dense<true> : vector<1x4x512xi1>
    %8 = arith.xori %7, %cst : vector<1x4x512xi1>
    %9 = arith.extui %8 : vector<1x4x512xi1> to vector<1x4x512xi32>
    %10 = arith.sitofp %9 : vector<1x4x512xi32> to vector<1x4x512xf32>
    %cst_9 = arith.constant dense<0x7F800000> : vector<1x512xf32>
    %11 = vector.multi_reduction <minimumf>, %10, %cst_9 [1] : vector<1x4x512xf32> to vector<1x512xf32>
    %12 = vector.shape_cast %11 : vector<1x512xf32> to vector<1x1x512xf32>
    %13 = arith.cmpf one, %4, %4 : vector<1x4x512xf32>
    %cst_10 = arith.constant 0.000000e+00 : f32
    %14 = vector.broadcast %cst_10 : f32 to vector<1x4x512xf32>
    %15 = arith.select %13, %14, %4 : vector<1x4x512xi1>, vector<1x4x512xf32>
    %cst_11 = arith.constant 0x7F800000 : f32
    %16 = vector.broadcast %cst_11 : f32 to vector<1x4x512xf32>
    %17 = arith.cmpf oeq, %15, %16 : vector<1x4x512xf32>
    %cst_12 = arith.constant 3.40282347E+38 : f32
    %18 = vector.broadcast %cst_12 : f32 to vector<1x4x512xf32>
    %19 = arith.select %17, %18, %15 : vector<1x4x512xi1>, vector<1x4x512xf32>
    %cst_13 = arith.constant 0xFF800000 : f32
    %20 = vector.broadcast %cst_13 : f32 to vector<1x4x512xf32>
    %21 = arith.cmpf oeq, %19, %20 : vector<1x4x512xf32>
    %cst_14 = arith.constant -3.40282347E+38 : f32
    %22 = vector.broadcast %cst_14 : f32 to vector<1x4x512xf32>
    %23 = arith.select %21, %22, %19 : vector<1x4x512xi1>, vector<1x4x512xf32>
    %24 = arith.subf %3, %23 : vector<1x4x512xf32>
    %25 = arith.mulf %24, %24 : vector<1x4x512xf32>
    %26 = arith.cmpf one, %25, %25 : vector<1x4x512xf32>
    %cst_15 = arith.constant 0.000000e+00 : f32
    %27 = vector.broadcast %cst_15 : f32 to vector<1x4x512xf32>
    %28 = arith.select %26, %27, %25 : vector<1x4x512xi1>, vector<1x4x512xf32>
    %cst_16 = arith.constant dense<0.000000e+00> : vector<1x512xf32>
    %29 = vector.multi_reduction <add>, %28, %cst_16 [1] : vector<1x4x512xf32> to vector<1x512xf32>
    %30 = vector.shape_cast %29 : vector<1x512xf32> to vector<1x1x512xf32>
    %cst_17 = arith.constant dense<true> : vector<1x4x512xi1>
    %31 = arith.xori %26, %cst_17 : vector<1x4x512xi1>
    %32 = arith.extui %31 : vector<1x4x512xi1> to vector<1x4x512xi32>
    %33 = arith.sitofp %32 : vector<1x4x512xi32> to vector<1x4x512xf32>
    %cst_18 = arith.constant dense<0.000000e+00> : vector<1x512xf32>
    %34 = vector.multi_reduction <add>, %33, %cst_18 [1] : vector<1x4x512xf32> to vector<1x512xf32>
    %35 = vector.shape_cast %34 : vector<1x512xf32> to vector<1x1x512xf32>
    %36 = arith.divf %30, %35 : vector<1x1x512xf32>
    %37 = arith.mulf %6, %12 : vector<1x1x512xf32>
    %38 = arith.mulf %36, %37 : vector<1x1x512xf32>
    %c0_19 = arith.constant 0 : index
    %c0_20 = arith.constant 0 : index
    %39 = vector.load %arg7[%c0_19, %c0_20] : memref<1x1xf32, #tpu.memory_space<vmem>>, vector<1x1xf32>
    %40 = arith.cmpf one, %38, %38 : vector<1x1x512xf32>
    %cst_21 = arith.constant 0.000000e+00 : f32
    %41 = vector.broadcast %cst_21 : f32 to vector<1x1x512xf32>
    %42 = arith.select %40, %41, %38 : vector<1x1x512xi1>, vector<1x1x512xf32>
    %43 = vector.shape_cast %42 : vector<1x1x512xf32> to vector<1x1x1x512xf32>
    %cst_22 = arith.constant dense<0.000000e+00> : vector<1xf32>
    %44 = vector.multi_reduction <add>, %43, %cst_22 [1, 2, 3] : vector<1x1x1x512xf32> to vector<1xf32>
    %45 = vector.shape_cast %44 : vector<1xf32> to vector<1x1x1x1xf32>
    %46 = vector.extract %45[0, 0, 0, 0] : f32 from vector<1x1x1x1xf32>
    %47 = vector.broadcast %46 : f32 to vector<1x1xf32>
    %48 = arith.addf %39, %47 : vector<1x1xf32>
    %c0_23 = arith.constant 0 : index
    %c0_24 = arith.constant 0 : index
    %49 = vector.load %arg7[%c0_23, %c0_24] : memref<1x1xf32, #tpu.memory_space<vmem>>, vector<1x1xf32>
    tpu.vector_store %arg7[%c0_23, %c0_24], %48 {strides = array<i32>} : memref<1x1xf32, #tpu.memory_space<vmem>>, vector<1x1xf32>,
    %c0_25 = arith.constant 0 : index
    %c0_26 = arith.constant 0 : index
    %50 = vector.load %arg8[%c0_25, %c0_26] : memref<1x1xf32, #tpu.memory_space<vmem>>, vector<1x1xf32>
    %51 = vector.shape_cast %37 : vector<1x1x512xf32> to vector<1x1x1x512xf32>
    %cst_27 = arith.constant dense<0.000000e+00> : vector<1xf32>
    %52 = vector.multi_reduction <add>, %51, %cst_27 [1, 2, 3] : vector<1x1x1x512xf32> to vector<1xf32>
    %53 = vector.shape_cast %52 : vector<1xf32> to vector<1x1x1x1xf32>
    %54 = vector.extract %53[0, 0, 0, 0] : f32 from vector<1x1x1x1xf32>
    %55 = vector.broadcast %54 : f32 to vector<1x1xf32>
    %56 = arith.addf %50, %55 : vector<1x1xf32>
    %c0_28 = arith.constant 0 : index
    %c0_29 = arith.constant 0 : index
    %57 = vector.load %arg8[%c0_28, %c0_29] : memref<1x1xf32, #tpu.memory_space<vmem>>, vector<1x1xf32>
    tpu.vector_store %arg8[%c0_28, %c0_29], %56 {strides = array<i32>} : memref<1x1xf32, #tpu.memory_space<vmem>>, vector<1x1xf32>,
    %c3_i32 = arith.constant 3 : i32
    %58 = arith.cmpi eq, %arg1, %c3_i32 : i32
    %59 = arith.extui %58 : i1 to i32
    %c0_i32_30 = arith.constant 0 : i32
    %60 = arith.cmpi ne, %59, %c0_i32_30 : i32
    scf.if %60 {
      %c0_31 = arith.constant 0 : index
      %c0_32 = arith.constant 0 : index
      %61 = vector.load %arg7[%c0_31, %c0_32] : memref<1x1xf32, #tpu.memory_space<vmem>>, vector<1x1xf32>
      %62 = vector.shape_cast %61 : vector<1x1xf32> to vector<1x1x1xf32>
      %63 = vector.broadcast %62 : vector<1x1x1xf32> to vector<1x1x128xf32>
      %c0_33 = arith.constant 0 : index
      %c0_34 = arith.constant 0 : index
      %c0_35 = arith.constant 0 : index
      %64 = vector.load %arg5[%c0_33, %c0_34, %c0_35] : memref<1x1x128xf32, #tpu.memory_space<vmem>>, vector<1x1x128xf32>
      tpu.vector_store %arg5[%c0_33, %c0_34, %c0_35], %63 {strides = array<i32>} : memref<1x1x128xf32, #tpu.memory_space<vmem>>, vector<1x1x128xf32>,
      %c0_36 = arith.constant 0 : index
      %c0_37 = arith.constant 0 : index
      %65 = vector.load %arg8[%c0_36, %c0_37] : memref<1x1xf32, #tpu.memory_space<vmem>>, vector<1x1xf32>
      %66 = vector.shape_cast %65 : vector<1x1xf32> to vector<1x1x1xf32>
      %67 = vector.broadcast %66 : vector<1x1x1xf32> to vector<1x1x128xf32>
      %c0_38 = arith.constant 0 : index
      %c0_39 = arith.constant 0 : index
      %c0_40 = arith.constant 0 : index
      %68 = vector.load %arg6[%c0_38, %c0_39, %c0_40] : memref<1x1x128xf32, #tpu.memory_space<vmem>>, vector<1x1x128xf32>
      tpu.vector_store %arg6[%c0_38, %c0_39, %c0_40], %67 {strides = array<i32>} : memref<1x1x128xf32, #tpu.memory_space<vmem>>, vector<1x1x128xf32>,
    } else {
    }
    return
  }
  func.func @transform_0(%arg0: i32, %arg1: i32) -> (i32, i32, i32) {
    %c0_i32 = arith.constant 0 : i32
    %c0_i32_0 = arith.constant 0 : i32
    return %arg0, %c0_i32, %arg1 : i32, i32, i32
  }
  func.func @transform_1(%arg0: i32, %arg1: i32) -> (i32, i32, i32) {
    %c0_i32 = arith.constant 0 : i32
    %c0_i32_0 = arith.constant 0 : i32
    return %arg0, %c0_i32, %arg1 : i32, i32, i32
  }
  func.func @transform_2(%arg0: i32, %arg1: i32) -> (i32, i32, i32) {
    %c0_i32 = arith.constant 0 : i32
    %c0_i32_0 = arith.constant 0 : i32
    return %arg0, %c0_i32, %arg1 : i32, i32, i32
  }
  func.func @transform_3(%arg0: i32, %arg1: i32) -> (i32, i32, i32) {
    %c0_i32 = arith.constant 0 : i32
    %c0_i32_0 = arith.constant 0 : i32
    %c0_i32_1 = arith.constant 0 : i32
    return %arg0, %c0_i32, %c0_i32_0 : i32, i32, i32
  }
  func.func @transform_4(%arg0: i32, %arg1: i32) -> (i32, i32, i32) {
    %c0_i32 = arith.constant 0 : i32
    %c0_i32_0 = arith.constant 0 : i32
    %c0_i32_1 = arith.constant 0 : i32
    return %arg0, %c0_i32, %c0_i32_0 : i32, i32, i32
  }
}

</mosaic_0001>

<llo_original>
// kernel: tpu_custom_call.1
$region0: #{tpu_custom_call.1}
  #allocation0 [shape = 'u32[]', space=smem, size = 0x4, offset = 0x4, fixed_abs, tag = 'smem constant byte address 0x4 - core index']
  #allocation1 [shape = 'u32[144,128]{1,0:T(1,128)}', space=vmem, size = 0x12000, scoped, tag = 'internal scratch']
  #allocation2 [shape = 'f32[1,1]{1,0:T(1,128)}', space=vmem, size = 0x200, scoped, tag = 'scratch operand']
  #allocation3 [shape = 'f32[1,1]{1,0:T(1,128)}', space=vmem, size = 0x200, scoped, tag = 'scratch operand']
  %s0 = inlined_call_operand.hbm [shape: f32[2,4,2048], index: 0, kind: input, shape index: {}]
  %s1 = inlined_call_operand.hbm [shape: f32[2,4,2048], index: 1, kind: input, shape index: {}]
  %s2 = inlined_call_operand.vmem [shape: bf16[2,1,2048], index: 2, kind: input, shape index: {}]
  %s3 = inlined_call_operand.hbm [shape: f32[2,1,128], index: 3, kind: output, shape index: {0}]
  %s4 = inlined_call_operand.hbm [shape: f32[2,1,128], index: 4, kind: output, shape index: {1}]
  %5 = xla_tuple %s3, %s4
  %s6 = sld [smem:[#allocation0]]
  $region69: #{tpu_custom_call.1} parent=0
    _
  %s8 = ssub.s32 1, %s6
  %s9 = scalar_select 0, %s8, %s6
  $region1: #{tpu_custom_call.1} parent=0
    #allocation4 [shape = 'u8[16384]{0}', space=vmem, size = 0x4000, scoped, tag = 'input window, operand 0']
    #allocation5 [shape = 's32[2]{0}', space=sflag, size = 0x8, scoped, tag = 'scoped memory for tpu_custom_call.1']
    #allocation6 [shape = 's32[2]{0}', space=sflag, size = 0x8, scoped, tag = 'scoped memory for tpu_custom_call.1']
    #allocation7 [shape = 'u8[16384]{0}', space=vmem, size = 0x4000, scoped, tag = 'input window, operand 1']
    #allocation8 [shape = 's32[2]{0}', space=sflag, size = 0x8, scoped, tag = 'scoped memory for tpu_custom_call.1']
    #allocation9 [shape = 'u8[1024]{0}', space=vmem, size = 0x400, scoped, tag = 'output window, operand 0']
    #allocation10 [shape = 'u8[1024]{0}', space=vmem, size = 0x400, scoped, tag = 'output window, operand 1']
    #allocation11 [shape = 's32[2]{0}', space=sflag, size = 0x8, scoped, tag = 'scoped memory for tpu_custom_call.1']
    %10 = vsyncpa [#allocation5], 0
    %s11 = scalar_lea.sflag [#allocation5], 1
    %12 = vsyncpa %s11, 0
    %13 = vsyncpa [#allocation8], 0
    %s14 = scalar_lea.sflag [#allocation8], 1
    %15 = vsyncpa %s14, 0
    %16 = vsyncpa [#allocation6], 0
    %s17 = scalar_lea.sflag [#allocation6], 1
    %18 = vsyncpa %s17, 0
    %19 = vsyncpa [#allocation11], 0
    %s20 = scalar_lea.sflag [#allocation11], 1
    %21 = vsyncpa %s20, 0
    loop: start=0, step=1, limit=10
    $region2: #{tpu_custom_call.1} parent=1 // loop_pre_header
      _
    $region3: #{tpu_custom_call.1} parent=1 // loop_header
      %s23 = sphi 0, %s27
      %p24 = scmp.ge.s32.totalorder %s23, 10
      %s30 = sphi 0, %s42
      %s31 = sphi 0, %s38
      %s32 = sphi 0, %s30
      %s33 = sphi 0, %s31
      %s34 = sphi 0, %s32
      %s35 = sphi 0, %s33
      %s47 = sphi 0, %s49
      %s50 = sphi 0, %s47
      %s51 = sphi 0, %s50
      %s67 = sphi 0, %s51
      %s75 = sphi 0, %s77
      %s78 = sphi 0, %s75
      %s79 = sphi 0, %s78
      %s95 = sphi 0, %s79
      %s103 = sphi 0, %s105
      %s106 = sphi 0, %s103
      %s107 = sphi 0, %s106
      %s123 = sphi 0, %s107
      %s129 = sphi 0, %s131
      %s132 = sphi 0, %s129
      %s133 = sphi 0, %s132
      %s149 = sphi 0, %s133
      %s155 = sphi 0, %s157
      %s158 = sphi 0, %s155
      %s159 = sphi 0, %s158
      %s175 = sphi 0, %s159
    $region4: #{tpu_custom_call.1} parent=1 // loop_header_branch
      %26 = sbr.rel (%p24) target = $region8
    $region5: #{tpu_custom_call.1} parent=1 // loop_body
      %s28 = ssub.s32 %s23, 1
      %s29 = ssub.s32 %s23, 2
      %s36 = sadd.s32 1, %s31
      %p37 = scmp.ge.s32.totalorder %s36, 4
      %s38 = scalar_select %p37, 0, %s36
      %s39 = sadd.s32 1, %s30
      %s40 = scalar_select %p37, %s39, %s30
      %p41 = scmp.ge.s32.totalorder %s40, 2
      %s42 = scalar_select %p41, 0, %s40
      %s43 = ssub.s32 %s30, %s42
      %s44 = ssub.s32 %s31, %s38
      %s45 = sor.u32 %s43, %s44
      %p46 = scmp.eq.s32.totalorder %s45, 0
      %s48 = sadd.s32 %s47, 1
      %s49 = scalar_select %p46, %s47, %s48
      %p52 = pneg %p46
      %p53 = scmp.eq.s32.totalorder %s23, 7
      %p54 = por %p52, %p53
      %p55 = scmp.ne.s32.totalorder %s47, %s50
      %p56 = scmp.eq.s32.totalorder %s23, 0
      %p57 = por %p55, %p56
      %p58 = scmp.ne.s32.totalorder %s47, %s50
      %p59 = scmp.eq.s32.totalorder %s28, 7
      %p60 = por %p58, %p59
      %p61 = scmp.ne.s32.totalorder %s50, %s51
      %p62 = scmp.eq.s32.totalorder %s28, 0
      %p63 = por %p61, %p62
      %p64 = scmp.ne.s32.totalorder %s50, %s51
      %p65 = scmp.eq.s32.totalorder %s29, 7
      %p66 = por %p64, %p65
      %p68 = scmp.ne.s32.totalorder %s51, %s67
      %p69 = scmp.eq.s32.totalorder %s29, 0
      %p70 = por %p68, %p69
      %s71 = ssub.s32 %s30, %s42
      %s72 = ssub.s32 %s31, %s38
      %s73 = sor.u32 %s71, %s72
      %p74 = scmp.eq.s32.totalorder %s73, 0
      %s76 = sadd.s32 %s75, 1
      %s77 = scalar_select %p74, %s75, %s76
      %p80 = pneg %p74
      %p81 = scmp.eq.s32.totalorder %s23, 7
      %p82 = por %p80, %p81
      %p83 = scmp.ne.s32.totalorder %s75, %s78
      %p84 = scmp.eq.s32.totalorder %s23, 0
      %p85 = por %p83, %p84
      %p86 = scmp.ne.s32.totalorder %s75, %s78
      %p87 = scmp.eq.s32.totalorder %s28, 7
      %p88 = por %p86, %p87
      %p89 = scmp.ne.s32.totalorder %s78, %s79
      %p90 = scmp.eq.s32.totalorder %s28, 0
      %p91 = por %p89, %p90
      %p92 = scmp.ne.s32.totalorder %s78, %s79
      %p93 = scmp.eq.s32.totalorder %s29, 7
      %p94 = por %p92, %p93
      %p96 = scmp.ne.s32.totalorder %s79, %s95
      %p97 = scmp.eq.s32.totalorder %s29, 0
      %p98 = por %p96, %p97
      %s99 = ssub.s32 %s30, %s42
      %s100 = ssub.s32 %s31, %s38
      %s101 = sor.u32 %s99, %s100
      %p102 = scmp.eq.s32.totalorder %s101, 0
      %s104 = sadd.s32 %s103, 1
      %s105 = scalar_select %p102, %s103, %s104
      %p108 = pneg %p102
      %p109 = scmp.eq.s32.totalorder %s23, 7
      %p110 = por %p108, %p109
      %p111 = scmp.ne.s32.totalorder %s103, %s106
      %p112 = scmp.eq.s32.totalorder %s23, 0
      %p113 = por %p111, %p112
      %p114 = scmp.ne.s32.totalorder %s103, %s106
      %p115 = scmp.eq.s32.totalorder %s28, 7
      %p116 = por %p114, %p115
      %p117 = scmp.ne.s32.totalorder %s106, %s107
      %p118 = scmp.eq.s32.totalorder %s28, 0
      %p119 = por %p117, %p118
      %p120 = scmp.ne.s32.totalorder %s106, %s107
      %p121 = scmp.eq.s32.totalorder %s29, 7
      %p122 = por %p120, %p121
      %p124 = scmp.ne.s32.totalorder %s107, %s123
      %p125 = scmp.eq.s32.totalorder %s29, 0
      %p126 = por %p124, %p125
      %s127 = ssub.s32 %s30, %s42
      %p128 = scmp.eq.s32.totalorder %s127, 0
      %s130 = sadd.s32 %s129, 1
      %s131 = scalar_select %p128, %s129, %s130
      %p134 = pneg %p128
      %p135 = scmp.eq.s32.totalorder %s23, 7
      %p136 = por %p134, %p135
      %p137 = scmp.ne.s32.totalorder %s129, %s132
      %p138 = scmp.eq.s32.totalorder %s23, 0
      %p139 = por %p137, %p138
      %p140 = scmp.ne.s32.totalorder %s129, %s132
      %p141 = scmp.eq.s32.totalorder %s28, 7
      %p142 = por %p140, %p141
      %p143 = scmp.ne.s32.totalorder %s132, %s133
      %p144 = scmp.eq.s32.totalorder %s28, 0
      %p145 = por %p143, %p144
      %p146 = scmp.ne.s32.totalorder %s132, %s133
      %p147 = scmp.eq.s32.totalorder %s29, 7
      %p148 = por %p146, %p147
      %p150 = scmp.ne.s32.totalorder %s133, %s149
      %p151 = scmp.eq.s32.totalorder %s29, 0
      %p152 = por %p150, %p151
      %s153 = ssub.s32 %s30, %s42
      %p154 = scmp.eq.s32.totalorder %s153, 0
      %s156 = sadd.s32 %s155, 1
      %s157 = scalar_select %p154, %s155, %s156
      %p160 = pneg %p154
      %p161 = scmp.eq.s32.totalorder %s23, 7
      %p162 = por %p160, %p161
      %p163 = scmp.ne.s32.totalorder %s155, %s158
      %p164 = scmp.eq.s32.totalorder %s23, 0
      %p165 = por %p163, %p164
      %p166 = scmp.ne.s32.totalorder %s155, %s158
      %p167 = scmp.eq.s32.totalorder %s28, 7
      %p168 = por %p166, %p167
      %p169 = scmp.ne.s32.totalorder %s158, %s159
      %p170 = scmp.eq.s32.totalorder %s28, 0
      %p171 = por %p169, %p170
      %p172 = scmp.ne.s32.totalorder %s158, %s159
      %p173 = scmp.eq.s32.totalorder %s29, 7
      %p174 = por %p172, %p173
      %p176 = scmp.ne.s32.totalorder %s159, %s175
      %p177 = scmp.eq.s32.totalorder %s29, 0
      %p178 = por %p176, %p177
      %p179 = scmp.le.s32.totalorder 1, %s23
      %p180 = scmp.lt.s32.totalorder %s23, 9
      %p181 = pnand %p179, %p180
      %p182 = pneg %p181
      // Predicated region
      $region9: #{tpu_custom_call.1} parent=5 // pred_check
        _
      $region10: #{tpu_custom_call.1} parent=5 // pred_check_branch
        %184 = sbr.rel (%p181) target = $region12
      $region11: #{tpu_custom_call.1} parent=5 // pred_region
        %s185 = ssub.s32 %s23, 1
      $region12: #{tpu_custom_call.1} parent=5 // pred_fallthru
        _
      %p186 = scmp.lt.s32.totalorder %s23, 8
      // Predicated region
      $region13: #{tpu_custom_call.1} parent=5 // pred_check
        %p187 = pneg %p186
      $region14: #{tpu_custom_call.1} parent=5 // pred_check_branch
        %189 = sbr.rel (%p187) target = $region16
      $region15: #{tpu_custom_call.1} parent=5 // pred_region
        // Predicated region
        $region17: #{tpu_custom_call.1} parent=15 // pred_check
          %p190 = pneg %p57
        $region18: #{tpu_custom_call.1} parent=15 // pred_check_branch
          %192 = sbr.rel (%p190) target = $region20
        $region19: #{tpu_custom_call.1} parent=15 // pred_region
          %s193 = sand.u32 %s47, 1
          %s194 = scalar_lea.sflag [#allocation5], %s193
          %s195 = sand.u32 %s47, 1
          %s196 = smul.addr %s195, 16
          %s197 = scalar_lea.vmem [#allocation4], %s196
          %s198 = smul.u32 4, %s31
          %s200 = ssub.s32 256, 256
          %201 = vsyncadd %s194, %s200
          %s202 = smul.addr %s30, 16
          %s203 = sadd.s32 %s198, %s202
          %s204 = smul.addr %s203, 64
          %s205 = scalar_lea.hbm %s0, %s204
          %s207 = sshll.u32 %s197, 4
          %s208 = int_to_ptr.vmem [resolvable:$true] %s207
          %210 = dma.hbm_to_vmem [thread:$0]  %s205, 256, %s208, %s194
        $region20: #{tpu_custom_call.1} parent=15 // pred_fallthru
          _
        // Predicated region
        $region21: #{tpu_custom_call.1} parent=15 // pred_check
          %p211 = pneg %p85
        $region22: #{tpu_custom_call.1} parent=15 // pred_check_branch
          %213 = sbr.rel (%p211) target = $region24
        $region23: #{tpu_custom_call.1} parent=15 // pred_region
          %s214 = sand.u32 %s75, 1
          %s215 = scalar_lea.sflag [#allocation8], %s214
          %s216 = sand.u32 %s75, 1
          %s217 = smul.addr %s216, 16
          %s218 = scalar_lea.vmem [#allocation7], %s217
          %s219 = smul.u32 4, %s31
          %s221 = ssub.s32 256, 256
          %222 = vsyncadd %s215, %s221
          %s223 = smul.addr %s30, 16
          %s224 = sadd.s32 %s219, %s223
          %s225 = smul.addr %s224, 64
          %s226 = scalar_lea.hbm %s1, %s225
          %s228 = sshll.u32 %s218, 4
          %s229 = int_to_ptr.vmem [resolvable:$true] %s228
          %231 = dma.hbm_to_vmem [thread:$0]  %s226, 256, %s229, %s215
        $region24: #{tpu_custom_call.1} parent=15 // pred_fallthru
          _
        // Predicated region
        $region25: #{tpu_custom_call.1} parent=15 // pred_check
          %p232 = pneg %p113
        $region26: #{tpu_custom_call.1} parent=15 // pred_check_branch
          %234 = sbr.rel (%p232) target = $region28
        $region27: #{tpu_custom_call.1} parent=15 // pred_region
          %s235 = smul.u32 4, %s31
          %p236 = scmp.lt.s32.totalorder %s30, 1
          %s237 = scalar_select %p236, %s30, 1
          %p238 = scmp.lt.s32.totalorder %s235, 15
          %s239 = scalar_select %p238, %s235, 15
          %s240 = smul.addr %s237, 16
          %s241 = sadd.s32 %s239, %s240
          %s242 = scalar_lea.vmem %s2, %s241
          %s243 = smul.u32 4, %s31
        $region28: #{tpu_custom_call.1} parent=15 // pred_fallthru
          _
      $region16: #{tpu_custom_call.1} parent=5 // pred_fallthru
        _
      %p244 = scmp.le.s32.totalorder 1, %s23
      %p245 = scmp.lt.s32.totalorder %s23, 9
      %p246 = pnand %p244, %p245
      %p247 = pneg %p246
      // Predicated region
      $region29: #{tpu_custom_call.1} parent=5 // pred_check
        _
      $region30: #{tpu_custom_call.1} parent=5 // pred_check_branch
        %249 = sbr.rel (%p246) target = $region32
      $region31: #{tpu_custom_call.1} parent=5 // pred_region
        %s250 = ssub.s32 %s23, 1
        %s251 = sand.u32 %s50, 1
        %s252 = scalar_lea.sflag [#allocation5], %s251
        %s253 = sand.u32 %s50, 1
        %s254 = smul.addr %s253, 16
        %s255 = scalar_lea.vmem [#allocation4], %s254
        // Predicated region
        $region33: #{tpu_custom_call.1} parent=31 // pred_check
          %p256 = pneg %p63
        $region34: #{tpu_custom_call.1} parent=31 // pred_check_branch
          %258 = sbr.rel (%p256) target = $region36
        $region35: #{tpu_custom_call.1} parent=31 // pred_region
          %259 = dma.done %s252, 256
        $region36: #{tpu_custom_call.1} parent=31 // pred_fallthru
          _
        %s260 = sand.u32 %s78, 1
        %s261 = scalar_lea.sflag [#allocation8], %s260
        %s262 = sand.u32 %s78, 1
        %s263 = smul.addr %s262, 16
        %s264 = scalar_lea.vmem [#allocation7], %s263
        // Predicated region
        $region37: #{tpu_custom_call.1} parent=31 // pred_check
          %p265 = pneg %p91
        $region38: #{tpu_custom_call.1} parent=31 // pred_check_branch
          %267 = sbr.rel (%p265) target = $region40
        $region39: #{tpu_custom_call.1} parent=31 // pred_region
          %268 = dma.done %s261, 256
        $region40: #{tpu_custom_call.1} parent=31 // pred_fallthru
          _
        %s269 = sand.u32 %s50, 1
        %s270 = scalar_lea.sflag [#allocation5], %s269
        %s271 = sand.u32 %s50, 1
        %s272 = smul.addr %s271, 16
        %s273 = scalar_lea.vmem [#allocation4], %s272
        %p274 = pneg %p63
        %p275 = pneg %p60
        %s276 = sand.u32 %s78, 1
        %s277 = scalar_lea.sflag [#allocation8], %s276
        %s278 = sand.u32 %s78, 1
        %s279 = smul.addr %s278, 16
        %s280 = scalar_lea.vmem [#allocation7], %s279
        %p281 = pneg %p91
        %p282 = pneg %p88
        %s283 = smul.u32 4, %s33
        %p284 = scmp.lt.s32.totalorder %s32, 1
        %s285 = scalar_select %p284, %s32, 1
        %p286 = scmp.lt.s32.totalorder %s283, 15
        %s287 = scalar_select %p286, %s283, 15
        %s288 = smul.addr %s285, 16
        %s289 = sadd.s32 %s287, %s288
        %s290 = scalar_lea.vmem %s2, %s289
        %p291 = pneg %p119
        %p292 = pneg %p116
        %p293 = pneg %p145
        %p294 = pneg %p142
        %s295 = sand.u32 %s132, 1
        %s296 = scalar_lea.sflag [#allocation6], %s295
        %s297 = sand.u32 %s132, 1
        %s298 = scalar_lea.vmem [#allocation9], %s297
        %p299 = pneg %p171
        %p300 = pneg %p168
        %s301 = sand.u32 %s158, 1
        %s302 = scalar_lea.sflag [#allocation11], %s301
        %s303 = sand.u32 %s158, 1
        %s304 = scalar_lea.vmem [#allocation10], %s303
        %s305 = smul.u32 4, %s33
        %s306 = smul.u32 4, %s33
        %s307 = smul.u32 4, %s33
        %p308 = scmp.lt.s32.totalorder %s32, 1
        %s309 = scalar_select %p308, %s32, 1
        %p310 = scmp.lt.s32.totalorder %s307, 15
        %s311 = scalar_select %p310, %s307, 15
        %s312 = smul.addr %s309, 16
        %s313 = sadd.s32 %s311, %s312
        %s314 = scalar_lea.vmem %s2, %s313
        %s315 = smul.u32 4, %s33
        %p316 = scmp.eq.s32.totalorder %s33, 0
        // Predicated region
        $region41: #{tpu_custom_call.1} parent=31 // pred_check
          %p317 = pneg %p316
        $region42: #{tpu_custom_call.1} parent=31 // pred_check_branch
          %319 = sbr.rel (%p317) target = $region44
        $region43: #{tpu_custom_call.1} parent=31 // pred_region
          %vm320 = vcmask 0
          %321 = vst.msk [vmem:[#allocation2] sm:$0x1] %vm320, 0.0
          %322 = vst.msk [vmem:[#allocation3] sm:$0x1] %vm320, 0.0
        $region44: #{tpu_custom_call.1} parent=31 // pred_fallthru
          _
        %v323 = vld [vmem:[%s255] sm:$0xff]
        %v324 = vld [vmem:[%s255 + $0x8] sm:$0xff]
        %v325 = vld [vmem:[%s264] sm:$0xff]
        %v326 = vld [vmem:[%s264 + $0x8] sm:$0xff]
        %v327 = vld [vmem:[%s314] sm:$0xf]
        %v328 = vunpack.c.l.bf16 %v327
        %vm329 = vweird.f32 %v325
        %vm330 = vweird.f32 %v326
        %vm331 = vmxor %vm329, 1
        %vm332 = vmxor %vm330, 1
        %v333 = vsel %vm331, 1, 0
        %v334 = vsel %vm332, 1, 0
        %v335 = vcvt.s32.f32 %v333
        %v336 = vcvt.s32.f32 %v334
        %v339 = vcombine.high %v335, %v335
        %v340 = vcombine.high %v336, %v336
        %vm343 = vcmask 1043456
        %v344 = vsel %vm343, %v335, inf
        %v345 = vrot.slane %v344, 4
        %v346 = vmin.f32 %v344, %v345
        %v347 = vrot.slane %v346, 2
        %v348 = vmin.f32 %v346, %v347
        %v349 = vrot.slane %v348, 1
        %v350 = vmin.f32 %v348, %v349
        %v351 = vsel %vm343, %v339, inf
        %v352 = vrot.slane %v351, 4
        %v353 = vmin.f32 %v351, %v352
        %v354 = vrot.slane %v353, 2
        %v355 = vmin.f32 %v353, %v354
        %v356 = vrot.slane %v355, 1
        %v357 = vmin.f32 %v355, %v356
        %v358 = vsel %vm343, %v336, inf
        %v359 = vrot.slane %v358, 4
        %v360 = vmin.f32 %v358, %v359
        %v361 = vrot.slane %v360, 2
        %v362 = vmin.f32 %v360, %v361
        %v363 = vrot.slane %v362, 1
        %v364 = vmin.f32 %v362, %v363
        %v365 = vsel %vm343, %v340, inf
        %v366 = vrot.slane %v365, 4
        %v367 = vmin.f32 %v365, %v366
        %v368 = vrot.slane %v367, 2
        %v369 = vmin.f32 %v367, %v368
        %v370 = vrot.slane %v369, 1
        %v371 = vmin.f32 %v369, %v370
        %vm372 = vcmp.ne.f32.partialorder %v325, %v325
        %vm373 = vcmp.ne.f32.partialorder %v326, %v326
        %v374 = vsel %vm372, 0.0, %v325
        %v375 = vsel %vm373, 0.0, %v326
        %vm376 = vcmp.eq.f32.partialorder %v374, inf
        %vm377 = vcmp.eq.f32.partialorder %v375, inf
        %v378 = vsel %vm376, 3.4028235e+38, %v374
        %v379 = vsel %vm377, 3.4028235e+38, %v375
        %vm380 = vcmp.eq.f32.partialorder %v378, -inf
        %vm381 = vcmp.eq.f32.partialorder %v379, -inf
        %v382 = vsel %vm380, -3.4028235e+38, %v378
        %v383 = vsel %vm381, -3.4028235e+38, %v379
        %v384 = vsub.f32 %v323, %v382
        %v385 = vsub.f32 %v324, %v383
        %v386 = vmul.f32 %v384, %v384
        %v387 = vmul.f32 %v385, %v385
        %vm388 = vcmp.ne.f32.partialorder %v386, %v386
        %vm389 = vcmp.ne.f32.partialorder %v387, %v387
        %v390 = vsel %vm388, 0.0, %v386
        %v391 = vsel %vm389, 0.0, %v387
        %v394 = vcombine.high %v390, %v390
        %v395 = vcombine.high %v391, %v391
        %v398 = vsel %vm343, %v390, 0.0
        %v399 = vrot.slane %v398, 4
        %v400 = vadd.f32 %v398, %v399
        %v401 = vrot.slane %v400, 2
        %v402 = vadd.f32 %v400, %v401
        %v403 = vrot.slane %v402, 1
        %v404 = vadd.f32 %v402, %v403
        %v405 = vsel %vm343, %v394, 0.0
        %v406 = vrot.slane %v405, 4
        %v407 = vadd.f32 %v405, %v406
        %v408 = vrot.slane %v407, 2
        %v409 = vadd.f32 %v407, %v408
        %v410 = vrot.slane %v409, 1
        %v411 = vadd.f32 %v409, %v410
        %v412 = vsel %vm343, %v391, 0.0
        %v413 = vrot.slane %v412, 4
        %v414 = vadd.f32 %v412, %v413
        %v415 = vrot.slane %v414, 2
        %v416 = vadd.f32 %v414, %v415
        %v417 = vrot.slane %v416, 1
        %v418 = vadd.f32 %v416, %v417
        %v419 = vsel %vm343, %v395, 0.0
        %v420 = vrot.slane %v419, 4
        %v421 = vadd.f32 %v419, %v420
        %v422 = vrot.slane %v421, 2
        %v423 = vadd.f32 %v421, %v422
        %v424 = vrot.slane %v423, 1
        %v425 = vadd.f32 %v423, %v424
        %vm426 = vmxor %vm388, 1
        %vm427 = vmxor %vm389, 1
        %v428 = vsel %vm426, 1, 0
        %v429 = vsel %vm427, 1, 0
        %v430 = vcvt.s32.f32 %v428
        %v431 = vcvt.s32.f32 %v429
        %v434 = vcombine.high %v430, %v430
        %v435 = vcombine.high %v431, %v431
        %v438 = vsel %vm343, %v430, 0.0
        %v439 = vrot.slane %v438, 4
        %v440 = vadd.f32 %v438, %v439
        %v441 = vrot.slane %v440, 2
        %v442 = vadd.f32 %v440, %v441
        %v443 = vrot.slane %v442, 1
        %v444 = vadd.f32 %v442, %v443
        %v445 = vsel %vm343, %v434, 0.0
        %v446 = vrot.slane %v445, 4
        %v447 = vadd.f32 %v445, %v446
        %v448 = vrot.slane %v447, 2
        %v449 = vadd.f32 %v447, %v448
        %v450 = vrot.slane %v449, 1
        %v451 = vadd.f32 %v449, %v450
        %v452 = vsel %vm343, %v431, 0.0
        %v453 = vrot.slane %v452, 4
        %v454 = vadd.f32 %v452, %v453
        %v455 = vrot.slane %v454, 2
        %v456 = vadd.f32 %v454, %v455
        %v457 = vrot.slane %v456, 1
        %v458 = vadd.f32 %v456, %v457
        %v459 = vsel %vm343, %v435, 0.0
        %v460 = vrot.slane %v459, 4
        %v461 = vadd.f32 %v459, %v460
        %v462 = vrot.slane %v461, 2
        %v463 = vadd.f32 %v461, %v462
        %v464 = vrot.slane %v463, 1
        %v465 = vadd.f32 %v463, %v464
        %v466 = vrcp.pop %v444
        %v467 = vmul.f32 %v404, %v466
        %v468 = vrcp.pop %v451
        %v469 = vmul.f32 %v411, %v468
        %v470 = vrcp.pop %v458
        %v471 = vmul.f32 %v418, %v470
        %v472 = vrcp.pop %v465
        %v473 = vmul.f32 %v425, %v472
        %v478 = vcombine.low %v350, %v357
        %v479 = vcombine.low %v364, %v371
        %v481 = vunpack.c.l.s4 1983009808
        %v482 = vunpack.c.0.s8 %v481
        %v483 = vlaneseq
        %v484 = vshrl.u32 %v483, 7
        %v485 = vsub.s32 %v482, %v484
        %v486 = vrot.slane %v478, %v485
        %v488 = vunpack.c.l.s4 1983009808
        %v489 = vunpack.c.0.s8 %v488
        %v490 = vlaneseq
        %v491 = vshrl.u32 %v490, 7
        %v492 = vsub.s32 %v489, %v491
        %v493 = vrot.slane %v479, %v492
        %v494 = vcombine.low %v486, %v493
        %v496 = vmul.f32 %v328, %v494
        %v498 = vlaneseq
        %v499 = vshrl.u32 %v498, 7
        %v500 = vsub.s32 0, %v499
        %v501 = vrot.slane %v496, %v500
        %v502 = vlaneseq
        %v503 = vshrl.u32 %v502, 7
        %v504 = vsub.s32 2, %v503
        %v505 = vrot.slane %v496, %v504
        %v506 = vlaneseq
        %v507 = vshrl.u32 %v506, 7
        %v508 = vsub.s32 4, %v507
        %v509 = vrot.slane %v496, %v508
        %v510 = vlaneseq
        %v511 = vshrl.u32 %v510, 7
        %v512 = vsub.s32 6, %v511
        %v513 = vrot.slane %v496, %v512
        %v518 = vmul.f32 %v467, %v501
        %v519 = vmul.f32 %v469, %v505
        %v520 = vmul.f32 %v471, %v509
        %v521 = vmul.f32 %v473, %v513
        %v522 = vld [vmem:[#allocation2] sm:$0x1]
        %vm523 = vcmp.ne.f32.partialorder %v518, %v518
        %vm524 = vcmp.ne.f32.partialorder %v519, %v519
        %vm525 = vcmp.ne.f32.partialorder %v520, %v520
        %vm526 = vcmp.ne.f32.partialorder %v521, %v521
        %v527 = vsel %vm523, 0.0, %v518
        %v528 = vsel %vm524, 0.0, %v519
        %v529 = vsel %vm525, 0.0, %v520
        %v530 = vsel %vm526, 0.0, %v521
        %vm531 = vcmask 1040384
        %v532 = vsel %vm531, %v527, 0.0
        %v533 = vsel %vm531, %v528, 0.0
        %v534 = vadd.f32 %v532, %v533
        %v535 = vsel %vm531, %v529, 0.0
        %v536 = vadd.f32 %v534, %v535
        %v537 = vsel %vm531, %v530, 0.0
        %v538 = vadd.f32 %v536, %v537
        %539 = vadd.xlane.f32.xlu0 %v538
        %v540 = vpop.xlane.xlu0 %539
        %v541 = vrot.slane %v540, 4
        %v542 = vadd.f32 %v540, %v541
        %v543 = vrot.slane %v542, 2
        %v544 = vadd.f32 %v542, %v543
        %v545 = vrot.slane %v544, 1
        %v546 = vadd.f32 %v544, %v545
        %s547 = vtos %v546
        %v548 = vstv %s547
        %v549 = vadd.f32 %v522, %v548
        %vm550 = vcmask 0
        %551 = vst.msk [vmem:[#allocation2] sm:$0x1] %vm550, %v549
        %v552 = vld [vmem:[#allocation3] sm:$0x1]
        %v553 = vsel %vm531, %v501, 0.0
        %v554 = vsel %vm531, %v505, 0.0
        %v555 = vadd.f32 %v553, %v554
        %v556 = vsel %vm531, %v509, 0.0
        %v557 = vadd.f32 %v555, %v556
        %v558 = vsel %vm531, %v513, 0.0
        %v559 = vadd.f32 %v557, %v558
        %560 = vadd.xlane.f32.xlu0 %v559
        %v561 = vpop.xlane.xlu0 %560
        %v562 = vrot.slane %v561, 4
        %v563 = vadd.f32 %v561, %v562
        %v564 = vrot.slane %v563, 2
        %v565 = vadd.f32 %v563, %v564
        %v566 = vrot.slane %v565, 1
        %v567 = vadd.f32 %v565, %v566
        %s568 = vtos %v567
        %v569 = vstv %s568
        %v570 = vadd.f32 %v552, %v569
        %571 = vst.msk [vmem:[#allocation3] sm:$0x1] %vm550, %v570
        %p572 = scmp.eq.s32.totalorder %s33, 3
        // Predicated region
        $region45: #{tpu_custom_call.1} parent=31 // pred_check
          %p573 = pneg %p572
        $region46: #{tpu_custom_call.1} parent=31 // pred_check_branch
          %575 = sbr.rel (%p573) target = $region48
        $region47: #{tpu_custom_call.1} parent=31 // pred_region
          %v576 = vld [vmem:[#allocation2] sm:$0x1]
          %578 = vset.pattern.permute.xlu0 0
          %579 = vperm.xlu0 %578, %v576
          %v580 = vpop.permute.xlu0 %579
          %v582 = vlaneseq
          %v583 = vshrl.u32 %v582, 7
          %v584 = vsub.s32 0, %v583
          %v585 = vrot.slane %v580, %v584
          %586 = vst [vmem:[%s298] sm:$0x1] %v585
          %v587 = vld [vmem:[#allocation3] sm:$0x1]
          %589 = vset.pattern.permute.xlu0 0
          %590 = vperm.xlu0 %589, %v587
          %v591 = vpop.permute.xlu0 %590
          %v593 = vlaneseq
          %v594 = vshrl.u32 %v593, 7
          %v595 = vsub.s32 0, %v594
          %v596 = vrot.slane %v591, %v595
          %597 = vst [vmem:[%s304] sm:$0x1] %v596
        $region48: #{tpu_custom_call.1} parent=31 // pred_fallthru
          _
        %s598 = sand.u32 %s132, 1
        %s599 = scalar_lea.sflag [#allocation6], %s598
        %s600 = sand.u32 %s132, 1
        %s601 = scalar_lea.vmem [#allocation9], %s600
        %s602 = sand.u32 %s158, 1
        %s603 = scalar_lea.sflag [#allocation11], %s602
        %s604 = sand.u32 %s158, 1
        %s605 = scalar_lea.vmem [#allocation10], %s604
        // Predicated region
        $region49: #{tpu_custom_call.1} parent=31 // pred_check
          %p606 = pneg %p142
        $region50: #{tpu_custom_call.1} parent=31 // pred_check_branch
          %608 = sbr.rel (%p606) target = $region52
        $region51: #{tpu_custom_call.1} parent=31 // pred_region
          %s610 = ssub.s32 16, 16
          %611 = vsyncadd %s599, %s610
          %s612 = smul.addr %s32, 16
          %s613 = scalar_lea.hbm %s3, %s612
          %s615 = sshll.u32 %s601, 4
          %s616 = int_to_ptr.vmem [resolvable:$true] %s615
          %618 = dma.vmem_to_hbm [thread:$0]  %s616, 16, %s613, %s599
        $region52: #{tpu_custom_call.1} parent=31 // pred_fallthru
          _
        // Predicated region
        $region53: #{tpu_custom_call.1} parent=31 // pred_check
          %p619 = pneg %p168
        $region54: #{tpu_custom_call.1} parent=31 // pred_check_branch
          %621 = sbr.rel (%p619) target = $region56
        $region55: #{tpu_custom_call.1} parent=31 // pred_region
          %s623 = ssub.s32 16, 16
          %624 = vsyncadd %s603, %s623
          %s625 = smul.addr %s32, 16
          %s626 = scalar_lea.hbm %s4, %s625
          %s628 = sshll.u32 %s605, 4
          %s629 = int_to_ptr.vmem [resolvable:$true] %s628
          %631 = dma.vmem_to_hbm [thread:$0]  %s629, 16, %s626, %s603
        $region56: #{tpu_custom_call.1} parent=31 // pred_fallthru
          _
      $region32: #{tpu_custom_call.1} parent=5 // pred_fallthru
        _
      %p632 = scmp.le.s32.totalorder 2, %s23
      // Predicated region
      $region57: #{tpu_custom_call.1} parent=5 // pred_check
        %p633 = pneg %p632
      $region58: #{tpu_custom_call.1} parent=5 // pred_check_branch
        %635 = sbr.rel (%p633) target = $region60
      $region59: #{tpu_custom_call.1} parent=5 // pred_region
        %s636 = ssub.s32 %s23, 2
        // Predicated region
        $region61: #{tpu_custom_call.1} parent=59 // pred_check
          %p637 = pneg %p148
        $region62: #{tpu_custom_call.1} parent=59 // pred_check_branch
          %639 = sbr.rel (%p637) target = $region64
        $region63: #{tpu_custom_call.1} parent=59 // pred_region
          %s640 = sand.u32 %s133, 1
          %s641 = scalar_lea.sflag [#allocation6], %s640
          %s642 = sand.u32 %s133, 1
          %s643 = scalar_lea.vmem [#allocation9], %s642
          %644 = dma.done %s641, 16
        $region64: #{tpu_custom_call.1} parent=59 // pred_fallthru
          _
        // Predicated region
        $region65: #{tpu_custom_call.1} parent=59 // pred_check
          %p645 = pneg %p174
        $region66: #{tpu_custom_call.1} parent=59 // pred_check_branch
          %647 = sbr.rel (%p645) target = $region68
        $region67: #{tpu_custom_call.1} parent=59 // pred_region
          %s648 = sand.u32 %s159, 1
          %s649 = scalar_lea.sflag [#allocation11], %s648
          %s650 = sand.u32 %s159, 1
          %s651 = scalar_lea.vmem [#allocation10], %s650
          %652 = dma.done %s649, 16
        $region68: #{tpu_custom_call.1} parent=59 // pred_fallthru
          _
      $region60: #{tpu_custom_call.1} parent=5 // pred_fallthru
        _
    $region6: #{tpu_custom_call.1} parent=1 // loop_footer
      %s27 = sadd.s32 1, %s23
    $region7: #{tpu_custom_call.1} parent=1 // loop_footer_branch
      %22 = sbr.rel target = $region3
    $region8: #{tpu_custom_call.1} parent=1 // loop_exit
      _
    %653 = vsyncpa [#allocation5], 1
    %s654 = scalar_lea.sflag [#allocation5], 1
    %655 = vsyncpa %s654, 1
    %656 = vsyncpa [#allocation8], 1
    %s657 = scalar_lea.sflag [#allocation8], 1
    %658 = vsyncpa %s657, 1
    %659 = vsyncpa [#allocation6], 1
    %s660 = scalar_lea.sflag [#allocation6], 1
    %661 = vsyncpa %s660, 1
    %662 = vsyncpa [#allocation11], 1
    %s663 = scalar_lea.sflag [#allocation11], 1
    %664 = vsyncpa %s663, 1

</llo_original>
